<compile_context>
chip_gen: v7x
topology: tpu7x:2x2x1
jax: 0.10.0
libtpu: 0.0.40
codegen_flags: <defaults>
</compile_context>

<pallas_src>
import functools

import jax
import jax.numpy as jnp
from jax.experimental import pallas as pl
from jax.experimental.pallas import tpu as pltpu


def _round_up(x: int, m: int) -> int:
    return ((x + m - 1) // m) * m


# Conservative so that even a double-buffered resident table plus output
# buffers fits v7x's 64 MiB VMEM (and the raised scoped limit on v5e/v6e).
_RESIDENT_TABLE_BUDGET_BYTES = 16 * 1024 * 1024


def _resident_gather_kernel(idx_ref, table_ref, out_ref, *, block_rows):
    """Whole table is VMEM-resident; gather `block_rows` rows per grid step."""
    base = pl.program_id(0) * block_rows

    def body(r, carry):
        row = idx_ref[base + r]
        out_ref[pl.ds(r, 1), :] = table_ref[pl.ds(row, 1), :]
        return carry

    jax.lax.fori_loop(0, block_rows, body, 0)


def _hbm_gather_kernel(idx_ref, emb_hbm, out_ref, rows_vmem, sems, *, block_rows):
    """Table stays in HBM; issue `block_rows` overlapping row DMAs per step."""
    base = pl.program_id(0) * block_rows

    def issue(b, carry):
        row = idx_ref[base + b]
        pltpu.make_async_copy(
            emb_hbm.at[pl.ds(row, 1), :],
            rows_vmem.at[pl.ds(b, 1), :],
            sems.at[b],
        ).start()
        return carry

    jax.lax.fori_loop(0, block_rows, issue, 0)

    def wait(b, carry):
        # Source slice is shape-only for the wait descriptor; sems[b] carries
        # the actual completion signal.
        pltpu.make_async_copy(
            emb_hbm.at[pl.ds(0, 1), :],
            rows_vmem.at[pl.ds(b, 1), :],
            sems.at[b],
        ).wait()
        return carry

    jax.lax.fori_loop(0, block_rows, wait, 0)

    out_ref[...] = rows_vmem[...].astype(out_ref.dtype)


def embedding_lookup(emb_table: jax.Array, indices: jax.Array, *,
                     block_rows: int | None = None,
                     force_hbm_path: bool = False) -> jax.Array:
    """Pallas equivalent of nn.Embedding(num_nodes, h_dim)(indices.squeeze())."""
    indices = jnp.squeeze(indices).astype(jnp.int32)   # h.squeeze()
    if indices.ndim == 0:
        indices = indices[None]
    assert indices.ndim == 1, "expects a 1-D node-id vector after squeeze"

    n = indices.shape[0]
    num_nodes, h_dim = emb_table.shape
    elem_bytes = jnp.dtype(emb_table.dtype).itemsize
    table_bytes = num_nodes * h_dim * elem_bytes

    # Clamp for robustness (OOB indices would otherwise rely on the DMA bounds
    # check only).
    indices = jnp.clip(indices, 0, num_nodes - 1)

    # Batch B indices per grid step: multiple of 8 (sublane-dense output),
    # capped at 256 to keep VMEM use modest.
    if block_rows is None:
        block_rows = min(256, _round_up(n, 8))
    block_rows = max(8, _round_up(int(block_rows), 8))

    n_pad = _round_up(n, block_rows)
    if n_pad != n:
        indices = jnp.pad(indices, (0, n_pad - n))   # pad rows read row 0

    grid = (n_pad // block_rows,)
    out_shape = jax.ShapeDtypeStruct((n_pad, h_dim), emb_table.dtype)

    use_resident = (not force_hbm_path) and (table_bytes <= _RESIDENT_TABLE_BUDGET_BYTES)

    if use_resident:
        # Whole table brought into VMEM once (constant block index -> resident
        # across the grid); gathers become in-VMEM dynamic row copies.
        vmem_needed = (2 * table_bytes
                       + 4 * block_rows * h_dim * elem_bytes
                       + (2 << 20))
        vmem_limit = min(max(vmem_needed, 32 * 1024 * 1024), 100 * 1024 * 1024)

        grid_spec = pltpu.PrefetchScalarGridSpec(
            num_scalar_prefetch=1,
            grid=grid,
            in_specs=[
                pl.BlockSpec((num_nodes, h_dim), lambda i, idx_ref: (0, 0)),
            ],
            out_specs=pl.BlockSpec((block_rows, h_dim), lambda i, idx_ref: (i, 0)),
        )
        out = pl.pallas_call(
            functools.partial(_resident_gather_kernel, block_rows=block_rows),
            grid_spec=grid_spec,
            out_shape=out_shape,
            compiler_params=pltpu.CompilerParams(
                dimension_semantics=("parallel",),
                vmem_limit_bytes=int(vmem_limit),
            ),
        )(indices, emb_table)
    else:
        # Large table: keep it in HBM and issue block_rows overlapping row DMAs
        # per grid step into a (block_rows, h_dim) VMEM scratch.
        grid_spec = pltpu.PrefetchScalarGridSpec(
            num_scalar_prefetch=1,
            grid=grid,
            in_specs=[pl.BlockSpec(memory_space=pl.ANY)],
            out_specs=pl.BlockSpec((block_rows, h_dim), lambda i, idx_ref: (i, 0)),
            scratch_shapes=[
                pltpu.VMEM((block_rows, h_dim), emb_table.dtype),
                pltpu.SemaphoreType.DMA((block_rows,)),
            ],
        )
        out = pl.pallas_call(
            functools.partial(_hbm_gather_kernel, block_rows=block_rows),
            grid_spec=grid_spec,
            out_shape=out_shape,
            compiler_params=pltpu.CompilerParams(
                dimension_semantics=("parallel",),
            ),
        )(indices, emb_table)

    if n_pad != n:
        out = out[:n]
    return out


class EmbeddingLayerPallas:
    """Mirrors the PyTorch EmbeddingLayer module."""

    def __init__(self, num_nodes: int, h_dim: int, key: jax.Array):
        # nn.Embedding default init: N(0, 1)
        self.entity_embedding = jax.random.normal(
            key, (num_nodes, h_dim), dtype=jnp.float32
        )

    def forward(self, g, h, r, norm):
        del g, r, norm  # unused, matching the reference module
        return embedding_lookup(self.entity_embedding, h)


if __name__ == "__main__":
    num_nodes = 64
    h_dim = 128
    n_idx = 8

    key = jax.random.PRNGKey(0)
    k_emb, k_idx, k_idx2 = jax.random.split(key, 3)

    layer = EmbeddingLayerPallas(num_nodes, h_dim, k_emb)

    # node-id tensor like the PyTorch `h` (shape (N, 1) before .squeeze())
    h = jax.random.randint(k_idx, (n_idx, 1), 0, num_nodes, dtype=jnp.int32)
    g = None
    r = jnp.zeros((n_idx,), jnp.int32)        # unused
    norm = jnp.ones((n_idx, 1), jnp.float32)  # unused

    # Default (VMEM-resident table) path.
    out = layer.forward(g, h, r, norm)
    out = jax.block_until_ready(out)
    ref = jnp.take(layer.entity_embedding, jnp.squeeze(h), axis=0)
    assert out.shape == (n_idx, h_dim)
    assert jnp.allclose(out, ref), "Pallas resident gather mismatch vs reference"

    # Also exercise the HBM manual-DMA fallback path, multi-step grid, and
    # an index count that is not a multiple of the block.
    n2 = 37
    h2 = jax.random.randint(k_idx2, (n2, 1), 0, num_nodes, dtype=jnp.int32)
    out2 = embedding_lookup(layer.entity_embedding, h2,
                            block_rows=16, force_hbm_path=True)
    out2 = jax.block_until_ready(out2)
    ref2 = jnp.take(layer.entity_embedding, jnp.squeeze(h2), axis=0)
    assert out2.shape == (n2, h_dim)
    assert jnp.allclose(out2, ref2), "Pallas HBM gather mismatch vs reference"

    print("KERNEL_OK")
</pallas_src>

<mosaic_0001>
module attributes {stable_mosaic.version = 11 : i64} {
  func.func @_resident_gather_kernel(%arg0: i32, %arg1: memref<8xi32, #tpu.memory_space<smem>>, %arg2: memref<64x128xf32, #tpu.memory_space<vmem>>, %arg3: memref<8x128xf32, #tpu.memory_space<vmem>>) attributes {dimension_semantics = [#tpu.dimension_semantics<parallel>], iteration_bounds = array<i64: 1>, scalar_prefetch = 1 : i64, scratch_operands = 0 : i64, tpu.core_type = #tpu.core_type<tc>, window_params = [{pipeline_mode = #tpu.pipeline_mode<synchronous>, transform_indices = @transform_0, window_bounds = array<i64: 64, 128>}, {transform_indices = @transform_1, window_bounds = array<i64: 8, 128>}]} {
    %c8_i32 = arith.constant 8 : i32
    %0 = arith.muli %arg0, %c8_i32 : i32
    %c0_i32 = arith.constant 0 : i32
    %c8_i32_0 = arith.constant 8 : i32
    %1 = arith.addi %c0_i32, %c8_i32_0 : i32
    %c1_i32 = arith.constant 1 : i32
    scf.for %arg4 = %c0_i32 to %1 step %c1_i32  : i32 {
      %2 = arith.addi %0, %arg4 : i32
      %3 = arith.index_cast %2 : i32 to index
      %4 = memref.load %arg1[%3] : memref<8xi32, #tpu.memory_space<smem>>
      %5 = arith.index_cast %4 : i32 to index
      %c0 = arith.constant 0 : index
      %6 = vector.load %arg2[%5, %c0] : memref<64x128xf32, #tpu.memory_space<vmem>>, vector<1x128xf32>
      %7 = arith.index_cast %arg4 : i32 to index
      %c0_2 = arith.constant 0 : index
      %8 = vector.load %arg3[%7, %c0_2] : memref<8x128xf32, #tpu.memory_space<vmem>>, vector<1x128xf32>
      tpu.vector_store %arg3[%7, %c0_2], %6 {strides = array<i32>} : memref<8x128xf32, #tpu.memory_space<vmem>>, vector<1x128xf32>,
    }
    %c8_i32_1 = arith.constant 8 : i32
    return
  }
  func.func @transform_0(%arg0: i32, %arg1: memref<8xi32, #tpu.memory_space<smem>>) -> (i32, i32) {
    %c0_i32 = arith.constant 0 : i32
    %c0_i32_0 = arith.constant 0 : i32
    %c0_i32_1 = arith.constant 0 : i32
    return %c0_i32, %c0_i32_0 : i32, i32
  }
  func.func @transform_1(%arg0: i32, %arg1: memref<8xi32, #tpu.memory_space<smem>>) -> (i32, i32) {
    %c0_i32 = arith.constant 0 : i32
    %c0_i32_0 = arith.constant 0 : i32
    return %arg0, %c0_i32 : i32, i32
  }
}

</mosaic_0001>

<llo_original>
// kernel: tpu_custom_call.1
$region0: #{tpu_custom_call.1}
  #allocation0 [shape = 'u32[]', space=smem, size = 0x4, offset = 0x4, fixed_abs, tag = 'smem constant byte address 0x4 - core index']
  #allocation1 [shape = 'u32[144,128]{1,0:T(1,128)}', space=vmem, size = 0x12000, scoped, tag = 'internal scratch']
  #allocation2 [shape = 's32[1]{0}', space=sflag, size = 0x4, scoped, tag = 'scoped memory for tpu_custom_call.1']
  #allocation3 [shape = 'u8[512]{0}', space=smem, size = 0x200, scoped, tag = 'prefetched SMEM operand 0']
  %s0 = inlined_call_operand.hbm [shape: s32[8], index: 0, kind: input, shape index: {}]
  %s1 = inlined_call_operand.hbm [shape: f32[64,128], index: 1, kind: input, shape index: {}]
  %s2 = inlined_call_operand.hbm [shape: f32[8,128], index: 2, kind: output, shape index: {}]
  %s3 = sld [smem:[#allocation0]]
  $region25: #{tpu_custom_call.1} parent=0
    _
  %s5 = ssub.s32 1, %s3
  %s6 = scalar_select 0, %s5, %s3
  %8 = dma.hbm_to_smem %s0, 16, [#allocation3], [#allocation2]
  %9 = dma.done [#allocation2], 16
  %10 = sfence
  $region1: #{tpu_custom_call.1} parent=0
    #allocation4 [shape = 'u8[32768]{0}', space=vmem, size = 0x8000, scoped, tag = 'input window, operand 1, single buffered']
    #allocation5 [shape = 's32[1]{0}', space=sflag, size = 0x4, scoped, tag = 'scoped memory for tpu_custom_call.1']
    #allocation6 [shape = 's32[1]{0}', space=sflag, size = 0x4, scoped, tag = 'scoped memory for tpu_custom_call.1']
    #allocation7 [shape = 'u8[4096]{0}', space=vmem, size = 0x1000, scoped, tag = 'output window, operand 0, single buffered']
    %11 = vsyncpa [#allocation5], 0
    %12 = vsyncpa [#allocation6], 0
    // Predicated region
    $region2: #{tpu_custom_call.1} parent=1 // pred_check
      _
    $region3: #{tpu_custom_call.1} parent=1 // pred_check_branch
      %14 = sbr.rel (0) target = $region5
    $region4: #{tpu_custom_call.1} parent=1 // pred_region
      %s16 = ssub.s32 1024, 1024
      %17 = vsyncadd [#allocation5], %s16
      %s18 = sshll.u32 [#allocation4], 4
      %s19 = int_to_ptr.vmem [resolvable:$true] %s18
      %24 = dma.hbm_to_vmem [thread:$0]  %s1, 1024, %s19, [#allocation5], 128, 128, 8
    $region5: #{tpu_custom_call.1} parent=1 // pred_fallthru
      _
    // Predicated region
    $region6: #{tpu_custom_call.1} parent=1 // pred_check
      _
    $region7: #{tpu_custom_call.1} parent=1 // pred_check_branch
      %26 = sbr.rel (0) target = $region9
    $region8: #{tpu_custom_call.1} parent=1 // pred_region
      %27 = dma.done [#allocation5], 1024
    $region9: #{tpu_custom_call.1} parent=1 // pred_fallthru
      _
    %s28 = smul.u32 0, 8
    loop: start=0, step=1, limit=8
    $region10: #{tpu_custom_call.1} parent=1 // loop_pre_header
      _
    $region11: #{tpu_custom_call.1} parent=1 // loop_header
      %s30 = sphi 0, %s34
      %p31 = scmp.ge.s32.totalorder %s30, 8
    $region12: #{tpu_custom_call.1} parent=1 // loop_header_branch
      %33 = sbr.rel (%p31) target = $region16
    $region13: #{tpu_custom_call.1} parent=1 // loop_body
      %s35 = sadd.s32 %s28, %s30
      %s36 = sld [smem:[#allocation3 + %s35]]
      %s37 = scalar_lea.vmem [#allocation4], %s36
      %v38 = vld [vmem:[%s37] sm:$0x1]
      %s39 = scalar_lea.vmem [#allocation7], %s30
      %40 = vst [vmem:[%s39] sm:$0x1] %v38
    $region14: #{tpu_custom_call.1} parent=1 // loop_footer
      %s34 = sadd.s32 1, %s30
    $region15: #{tpu_custom_call.1} parent=1 // loop_footer_branch
      %29 = sbr.rel target = $region11
    $region16: #{tpu_custom_call.1} parent=1 // loop_exit
      _
    // Predicated region
    $region17: #{tpu_custom_call.1} parent=1 // pred_check
      _
    $region18: #{tpu_custom_call.1} parent=1 // pred_check_branch
      %42 = sbr.rel (0) target = $region20
    $region19: #{tpu_custom_call.1} parent=1 // pred_region
      %s44 = ssub.s32 128, 128
      %45 = vsyncadd [#allocation6], %s44
      %s47 = sshll.u32 [#allocation7], 4
      %s48 = int_to_ptr.vmem [resolvable:$true] %s47
      %50 = dma.vmem_to_hbm [thread:$0]  %s48, 128, %s2, [#allocation6]
    $region20: #{tpu_custom_call.1} parent=1 // pred_fallthru
      _
    // Predicated region
    $region21: #{tpu_custom_call.1} parent=1 // pred_check
      _
    $region22: #{tpu_custom_call.1} parent=1 // pred_check_branch
      %52 = sbr.rel (0) target = $region24
    $region23: #{tpu_custom_call.1} parent=1 // pred_region
      %53 = dma.done [#allocation6], 128
    $region24: #{tpu_custom_call.1} parent=1 // pred_fallthru
      _
    %54 = vsyncpa [#allocation5], 1
    %55 = vsyncpa [#allocation6], 1

</llo_original>
